<compile_context>
chip_gen: v5e
topology: v5e:2x2
jax: 0.10.0
libtpu: 0.0.40
codegen_flags: <defaults>
</compile_context>

<pallas_src>
import jax
import jax.numpy as jnp
from jax.experimental import pallas as pl
from jax.experimental.pallas import tpu as pltpu

_LANE = 128  # lane-dense width for the fused branch and the packed output slab


def _actor_critic_upn_kernel(
    state_ref,
    enc_w1, enc_b1, enc_w2, enc_b2,
    fused_w1, fused_b1, fused_w2, fused_b2, fused_w3, fused_b3,
    out_ref,
):
    x = state_ref[...]  # (tile_b, n_states) f32

    # --- UPN encoder: Linear -> ReLU -> Linear ---
    h = jnp.dot(x, enc_w1[...], preferred_element_type=jnp.float32) + enc_b1[...]
    h = jnp.maximum(h, 0.0)
    z = jnp.dot(h, enc_w2[...], preferred_element_type=jnp.float32) + enc_b2[...]

    # --- fused actor||critic trunk: 3 lane-dense matmuls instead of 6 narrow ones ---
    h1 = jnp.tanh(
        jnp.dot(z, fused_w1[...], preferred_element_type=jnp.float32) + fused_b1[...]
    )  # (tile_b, 128): [actor hidden1 | critic hidden1]
    h2 = jnp.tanh(
        jnp.dot(h1, fused_w2[...], preferred_element_type=jnp.float32) + fused_b2[...]
    )  # (tile_b, 128): block-diag keeps branches independent
    slab = (
        jnp.dot(h2, fused_w3[...], preferred_element_type=jnp.float32) + fused_b3[...]
    )  # (tile_b, 128): lanes [0, n_actions) = action_mean, lane n_actions = value

    out_ref[...] = slab.astype(out_ref.dtype)


def _build_fused_weights(params, n_actions, hidden):
    """Build the fused actor+critic weights once (wrapper-side, not per kernel step)."""
    assert n_actions + 1 <= _LANE and 2 * hidden <= _LANE
    wide = 2 * hidden  # 128 for hidden=64

    fw1 = jnp.concatenate([params["act_w1"], params["cri_w1"]], axis=1)        # (latent, 128)
    fb1 = jnp.concatenate([params["act_b1"], params["cri_b1"]], axis=1)        # (1, 128)

    fw2 = jnp.zeros((wide, wide), jnp.float32)
    fw2 = fw2.at[:hidden, :hidden].set(params["act_w2"])
    fw2 = fw2.at[hidden:, hidden:].set(params["cri_w2"])                       # (128, 128)
    fb2 = jnp.concatenate([params["act_b2"], params["cri_b2"]], axis=1)        # (1, 128)

    fw3 = jnp.zeros((wide, _LANE), jnp.float32)
    fw3 = fw3.at[:hidden, :n_actions].set(params["act_w3"])
    fw3 = fw3.at[hidden:, n_actions:n_actions + 1].set(params["cri_w3"])       # (128, 128)
    fb3 = jnp.zeros((1, _LANE), jnp.float32)
    fb3 = fb3.at[:, :n_actions].set(params["act_b3"])
    fb3 = fb3.at[:, n_actions:n_actions + 1].set(params["cri_b3"])             # (1, 128)

    return fw1, fb1, fw2, fb2, fw3, fb3


def actor_critic_upn_forward(state, params, *, tile_b=None):
    """Runs ActorCriticUPN.forward. state: (B, n_states) f32. Returns (mean, std, value)."""
    B, n_states = state.shape
    n_actions = params["act_w3"].shape[1]
    hidden = params["act_w1"].shape[1]

    fused = _build_fused_weights(params, n_actions, hidden)

    # Batch tile: sized well under v7x's 64 MiB VMEM even with double-buffering
    # ((tile_b, 128) f32 activations are <=256 KiB at tile_b=512).
    if tile_b is None:
        tile_b = 512 if B >= 512 else max(8, ((B + 7) // 8) * 8)
    padded_B = ((B + tile_b - 1) // tile_b) * tile_b
    if padded_B != B:
        state_p = jnp.zeros((padded_B, n_states), state.dtype).at[:B].set(state)
    else:
        state_p = state

    weights = (
        params["enc_w1"], params["enc_b1"], params["enc_w2"], params["enc_b2"],
        *fused,
    )

    def _resident_spec(arr):
        # Full-array block, same block index every step -> stays resident in VMEM.
        return pl.BlockSpec(arr.shape, lambda i: (0, 0))

    in_specs = [pl.BlockSpec((tile_b, n_states), lambda i: (i, 0))]
    in_specs += [_resident_spec(a) for a in weights]

    slab = pl.pallas_call(
        _actor_critic_upn_kernel,
        out_shape=jax.ShapeDtypeStruct((padded_B, _LANE), jnp.float32),
        grid=(padded_B // tile_b,),
        in_specs=in_specs,
        out_specs=pl.BlockSpec((tile_b, _LANE), lambda i: (i, 0)),
        compiler_params=pltpu.CompilerParams(dimension_semantics=("parallel",)),
    )(state_p, *weights)

    action_mean = slab[:B, :n_actions]
    value = slab[:B, n_actions:n_actions + 1]
    # action_std is batch-independent: computed outside the kernel.
    action_std = jnp.broadcast_to(jnp.exp(params["log_std"]), action_mean.shape)
    return action_mean, action_std, value


def _linear_params(key, fan_in, fan_out):
    """Deterministic PyTorch-style init: U(-1/sqrt(fan_in), 1/sqrt(fan_in))."""
    kw, kb = jax.random.split(key)
    bound = 1.0 / (fan_in ** 0.5)
    w = jax.random.uniform(kw, (fan_in, fan_out), jnp.float32, -bound, bound)
    b = jax.random.uniform(kb, (1, fan_out), jnp.float32, -bound, bound)
    return w, b


def init_params(key, n_states, n_actions, latent_dim=32, hidden=64):
    keys = jax.random.split(key, 9)
    p = {}
    # UPN encoder (only part of UPN used by ActorCriticUPN.forward)
    p["enc_w1"], p["enc_b1"] = _linear_params(keys[0], n_states, hidden)
    p["enc_w2"], p["enc_b2"] = _linear_params(keys[1], hidden, latent_dim)
    # actor
    p["act_w1"], p["act_b1"] = _linear_params(keys[2], latent_dim, hidden)
    p["act_w2"], p["act_b2"] = _linear_params(keys[3], hidden, hidden)
    p["act_w3"], p["act_b3"] = _linear_params(keys[4], hidden, n_actions)
    # critic
    p["cri_w1"], p["cri_b1"] = _linear_params(keys[5], latent_dim, hidden)
    p["cri_w2"], p["cri_b2"] = _linear_params(keys[6], hidden, hidden)
    p["cri_w3"], p["cri_b3"] = _linear_params(keys[7], hidden, 1)
    # log_std parameter, init zeros like nn.Parameter(torch.zeros(1, n_actions))
    p["log_std"] = jnp.zeros((1, n_actions), jnp.float32)
    return p


def _reference_forward(state, p):
    """Pure-JAX reference for correctness check."""
    h = jnp.maximum(state @ p["enc_w1"] + p["enc_b1"], 0.0)
    z = h @ p["enc_w2"] + p["enc_b2"]
    a = jnp.tanh(z @ p["act_w1"] + p["act_b1"])
    a = jnp.tanh(a @ p["act_w2"] + p["act_b2"])
    mean = a @ p["act_w3"] + p["act_b3"]
    c = jnp.tanh(z @ p["cri_w1"] + p["cri_b1"])
    c = jnp.tanh(c @ p["cri_w2"] + p["cri_b2"])
    value = c @ p["cri_w3"] + p["cri_b3"]
    std = jnp.broadcast_to(jnp.exp(p["log_std"]), mean.shape)
    return mean, std, value


def _check(state, params, tile_b=None):
    mean, std, value = actor_critic_upn_forward(state, params, tile_b=tile_b)
    jax.block_until_ready((mean, std, value))
    ref_mean, ref_std, ref_value = _reference_forward(state, params)
    B = state.shape[0]
    n_actions = params["act_w3"].shape[1]
    assert mean.shape == (B, n_actions) and std.shape == (B, n_actions) and value.shape == (B, 1)
    assert jnp.allclose(mean, ref_mean, atol=1e-5, rtol=1e-5)
    assert jnp.allclose(std, ref_std, atol=1e-5, rtol=1e-5)
    assert jnp.allclose(value, ref_value, atol=1e-5, rtol=1e-5)


if __name__ == "__main__":
    n_states, n_actions, latent_dim = 16, 4, 32

    key = jax.random.PRNGKey(0)
    k_state, k_state2, k_params = jax.random.split(key, 3)
    params = init_params(k_params, n_states, n_actions, latent_dim)

    # Single-tile case (B=8, grid=(1,)).
    state = jax.random.normal(k_state, (8, n_states), jnp.float32)
    _check(state, params)

    # Multi-step grid + batch padding case (B=20 padded to 24, tile_b=8, grid=(3,)).
    state2 = jax.random.normal(k_state2, (20, n_states), jnp.float32)
    _check(state2, params, tile_b=8)

    print("KERNEL_OK")
</pallas_src>

<mosaic_0001>
module attributes {stable_mosaic.version = 11 : i64} {
  func.func @_actor_critic_upn_kernel(%arg0: i32, %arg1: memref<8x16xf32, #tpu.memory_space<vmem>>, %arg2: memref<16x64xf32, #tpu.memory_space<vmem>>, %arg3: memref<1x64xf32, #tpu.memory_space<vmem>>, %arg4: memref<64x32xf32, #tpu.memory_space<vmem>>, %arg5: memref<1x32xf32, #tpu.memory_space<vmem>>, %arg6: memref<32x128xf32, #tpu.memory_space<vmem>>, %arg7: memref<1x128xf32, #tpu.memory_space<vmem>>, %arg8: memref<128x128xf32, #tpu.memory_space<vmem>>, %arg9: memref<1x128xf32, #tpu.memory_space<vmem>>, %arg10: memref<128x128xf32, #tpu.memory_space<vmem>>, %arg11: memref<1x128xf32, #tpu.memory_space<vmem>>, %arg12: memref<8x128xf32, #tpu.memory_space<vmem>>) attributes {dimension_semantics = [#tpu.dimension_semantics<parallel>], iteration_bounds = array<i64: 1>, scalar_prefetch = 0 : i64, scratch_operands = 0 : i64, tpu.core_type = #tpu.core_type<tc>, window_params = [{transform_indices = @transform_0, window_bounds = array<i64: 8, 16>}, {pipeline_mode = #tpu.pipeline_mode<synchronous>, transform_indices = @transform_1, window_bounds = array<i64: 16, 64>}, {pipeline_mode = #tpu.pipeline_mode<synchronous>, transform_indices = @transform_2, window_bounds = array<i64: 1, 64>}, {pipeline_mode = #tpu.pipeline_mode<synchronous>, transform_indices = @transform_3, window_bounds = array<i64: 64, 32>}, {pipeline_mode = #tpu.pipeline_mode<synchronous>, transform_indices = @transform_4, window_bounds = array<i64: 1, 32>}, {pipeline_mode = #tpu.pipeline_mode<synchronous>, transform_indices = @transform_5, window_bounds = array<i64: 32, 128>}, {pipeline_mode = #tpu.pipeline_mode<synchronous>, transform_indices = @transform_6, window_bounds = array<i64: 1, 128>}, {pipeline_mode = #tpu.pipeline_mode<synchronous>, transform_indices = @transform_7, window_bounds = array<i64: 128, 128>}, {pipeline_mode = #tpu.pipeline_mode<synchronous>, transform_indices = @transform_8, window_bounds = array<i64: 1, 128>}, {pipeline_mode = #tpu.pipeline_mode<synchronous>, transform_indices = @transform_9, window_bounds = array<i64: 128, 128>}, {pipeline_mode = #tpu.pipeline_mode<synchronous>, transform_indices = @transform_10, window_bounds = array<i64: 1, 128>}, {transform_indices = @transform_11, window_bounds = array<i64: 8, 128>}]} {
    %c0 = arith.constant 0 : index
    %c0_0 = arith.constant 0 : index
    %0 = vector.load %arg1[%c0, %c0_0] : memref<8x16xf32, #tpu.memory_space<vmem>>, vector<8x16xf32>
    %c0_1 = arith.constant 0 : index
    %c0_2 = arith.constant 0 : index
    %1 = vector.load %arg2[%c0_1, %c0_2] : memref<16x64xf32, #tpu.memory_space<vmem>>, vector<16x64xf32>
    %cst = arith.constant dense<0.000000e+00> : vector<8x64xf32>
    %2 = tpu.matmul %0, %1, %cst {dimension_numbers = #tpu.dot_dimension_numbers<[1], [0], [0], [1], [0, 0, 1, 1], [], []>} : vector<8x16xf32>, vector<16x64xf32>, vector<8x64xf32> -> vector<8x64xf32>
    %c0_3 = arith.constant 0 : index
    %c0_4 = arith.constant 0 : index
    %3 = vector.load %arg3[%c0_3, %c0_4] : memref<1x64xf32, #tpu.memory_space<vmem>>, vector<1x64xf32>
    %4 = vector.broadcast %3 : vector<1x64xf32> to vector<8x64xf32>
    %5 = arith.addf %2, %4 : vector<8x64xf32>
    %cst_5 = arith.constant 0.000000e+00 : f32
    %6 = vector.broadcast %cst_5 : f32 to vector<8x64xf32>
    %7 = arith.maximumf %5, %6 : vector<8x64xf32>
    %c0_6 = arith.constant 0 : index
    %c0_7 = arith.constant 0 : index
    %8 = vector.load %arg4[%c0_6, %c0_7] : memref<64x32xf32, #tpu.memory_space<vmem>>, vector<64x32xf32>
    %cst_8 = arith.constant dense<0.000000e+00> : vector<8x32xf32>
    %9 = tpu.matmul %7, %8, %cst_8 {dimension_numbers = #tpu.dot_dimension_numbers<[1], [0], [0], [1], [0, 0, 1, 1], [], []>} : vector<8x64xf32>, vector<64x32xf32>, vector<8x32xf32> -> vector<8x32xf32>
    %c0_9 = arith.constant 0 : index
    %c0_10 = arith.constant 0 : index
    %10 = vector.load %arg5[%c0_9, %c0_10] : memref<1x32xf32, #tpu.memory_space<vmem>>, vector<1x32xf32>
    %11 = vector.broadcast %10 : vector<1x32xf32> to vector<8x32xf32>
    %12 = arith.addf %9, %11 : vector<8x32xf32>
    %c0_11 = arith.constant 0 : index
    %c0_12 = arith.constant 0 : index
    %13 = vector.load %arg6[%c0_11, %c0_12] : memref<32x128xf32, #tpu.memory_space<vmem>>, vector<32x128xf32>
    %cst_13 = arith.constant dense<0.000000e+00> : vector<8x128xf32>
    %14 = tpu.matmul %12, %13, %cst_13 {dimension_numbers = #tpu.dot_dimension_numbers<[1], [0], [0], [1], [0, 0, 1, 1], [], []>} : vector<8x32xf32>, vector<32x128xf32>, vector<8x128xf32> -> vector<8x128xf32>
    %c0_14 = arith.constant 0 : index
    %c0_15 = arith.constant 0 : index
    %15 = vector.load %arg7[%c0_14, %c0_15] : memref<1x128xf32, #tpu.memory_space<vmem>>, vector<1x128xf32>
    %16 = vector.broadcast %15 : vector<1x128xf32> to vector<8x128xf32>
    %17 = arith.addf %14, %16 : vector<8x128xf32>
    %18 = math.tanh %17 : vector<8x128xf32>
    %c0_16 = arith.constant 0 : index
    %c0_17 = arith.constant 0 : index
    %19 = vector.load %arg8[%c0_16, %c0_17] : memref<128x128xf32, #tpu.memory_space<vmem>>, vector<128x128xf32>
    %cst_18 = arith.constant dense<0.000000e+00> : vector<8x128xf32>
    %20 = tpu.matmul %18, %19, %cst_18 {dimension_numbers = #tpu.dot_dimension_numbers<[1], [0], [0], [1], [0, 0, 1, 1], [], []>} : vector<8x128xf32>, vector<128x128xf32>, vector<8x128xf32> -> vector<8x128xf32>
    %c0_19 = arith.constant 0 : index
    %c0_20 = arith.constant 0 : index
    %21 = vector.load %arg9[%c0_19, %c0_20] : memref<1x128xf32, #tpu.memory_space<vmem>>, vector<1x128xf32>
    %22 = vector.broadcast %21 : vector<1x128xf32> to vector<8x128xf32>
    %23 = arith.addf %20, %22 : vector<8x128xf32>
    %24 = math.tanh %23 : vector<8x128xf32>
    %c0_21 = arith.constant 0 : index
    %c0_22 = arith.constant 0 : index
    %25 = vector.load %arg10[%c0_21, %c0_22] : memref<128x128xf32, #tpu.memory_space<vmem>>, vector<128x128xf32>
    %cst_23 = arith.constant dense<0.000000e+00> : vector<8x128xf32>
    %26 = tpu.matmul %24, %25, %cst_23 {dimension_numbers = #tpu.dot_dimension_numbers<[1], [0], [0], [1], [0, 0, 1, 1], [], []>} : vector<8x128xf32>, vector<128x128xf32>, vector<8x128xf32> -> vector<8x128xf32>
    %c0_24 = arith.constant 0 : index
    %c0_25 = arith.constant 0 : index
    %27 = vector.load %arg11[%c0_24, %c0_25] : memref<1x128xf32, #tpu.memory_space<vmem>>, vector<1x128xf32>
    %28 = vector.broadcast %27 : vector<1x128xf32> to vector<8x128xf32>
    %29 = arith.addf %26, %28 : vector<8x128xf32>
    %c0_26 = arith.constant 0 : index
    %c0_27 = arith.constant 0 : index
    %30 = vector.load %arg12[%c0_26, %c0_27] : memref<8x128xf32, #tpu.memory_space<vmem>>, vector<8x128xf32>
    tpu.vector_store %arg12[%c0_26, %c0_27], %29 {strides = array<i32>} : memref<8x128xf32, #tpu.memory_space<vmem>>, vector<8x128xf32>,
    return
  }
  func.func @transform_0(%arg0: i32) -> (i32, i32) {
    %c0_i32 = arith.constant 0 : i32
    %c0_i32_0 = arith.constant 0 : i32
    return %arg0, %c0_i32 : i32, i32
  }
  func.func @transform_1(%arg0: i32) -> (i32, i32) {
    %c0_i32 = arith.constant 0 : i32
    %c0_i32_0 = arith.constant 0 : i32
    %c0_i32_1 = arith.constant 0 : i32
    return %c0_i32, %c0_i32_0 : i32, i32
  }
  func.func @transform_2(%arg0: i32) -> (i32, i32) {
    %c0_i32 = arith.constant 0 : i32
    %c0_i32_0 = arith.constant 0 : i32
    %c0_i32_1 = arith.constant 0 : i32
    return %c0_i32, %c0_i32_0 : i32, i32
  }
  func.func @transform_3(%arg0: i32) -> (i32, i32) {
    %c0_i32 = arith.constant 0 : i32
    %c0_i32_0 = arith.constant 0 : i32
    %c0_i32_1 = arith.constant 0 : i32
    return %c0_i32, %c0_i32_0 : i32, i32
  }
  func.func @transform_4(%arg0: i32) -> (i32, i32) {
    %c0_i32 = arith.constant 0 : i32
    %c0_i32_0 = arith.constant 0 : i32
    %c0_i32_1 = arith.constant 0 : i32
    return %c0_i32, %c0_i32_0 : i32, i32
  }
  func.func @transform_5(%arg0: i32) -> (i32, i32) {
    %c0_i32 = arith.constant 0 : i32
    %c0_i32_0 = arith.constant 0 : i32
    %c0_i32_1 = arith.constant 0 : i32
    return %c0_i32, %c0_i32_0 : i32, i32
  }
  func.func @transform_6(%arg0: i32) -> (i32, i32) {
    %c0_i32 = arith.constant 0 : i32
    %c0_i32_0 = arith.constant 0 : i32
    %c0_i32_1 = arith.constant 0 : i32
    return %c0_i32, %c0_i32_0 : i32, i32
  }
  func.func @transform_7(%arg0: i32) -> (i32, i32) {
    %c0_i32 = arith.constant 0 : i32
    %c0_i32_0 = arith.constant 0 : i32
    %c0_i32_1 = arith.constant 0 : i32
    return %c0_i32, %c0_i32_0 : i32, i32
  }
  func.func @transform_8(%arg0: i32) -> (i32, i32) {
    %c0_i32 = arith.constant 0 : i32
    %c0_i32_0 = arith.constant 0 : i32
    %c0_i32_1 = arith.constant 0 : i32
    return %c0_i32, %c0_i32_0 : i32, i32
  }
  func.func @transform_9(%arg0: i32) -> (i32, i32) {
    %c0_i32 = arith.constant 0 : i32
    %c0_i32_0 = arith.constant 0 : i32
    %c0_i32_1 = arith.constant 0 : i32
    return %c0_i32, %c0_i32_0 : i32, i32
  }
  func.func @transform_10(%arg0: i32) -> (i32, i32) {
    %c0_i32 = arith.constant 0 : i32
    %c0_i32_0 = arith.constant 0 : i32
    %c0_i32_1 = arith.constant 0 : i32
    return %c0_i32, %c0_i32_0 : i32, i32
  }
  func.func @transform_11(%arg0: i32) -> (i32, i32) {
    %c0_i32 = arith.constant 0 : i32
    %c0_i32_0 = arith.constant 0 : i32
    return %arg0, %c0_i32 : i32, i32
  }
}

</mosaic_0001>

<llo_original>
// kernel: tpu_custom_call.1
$region0: #{tpu_custom_call.1}
  #allocation0 [shape = 'u32[]', space=smem, size = 0x4, offset = 0x4, fixed_abs, tag = 'smem constant byte address 0x4 - core index']
  #allocation1 [shape = 'u32[72,128]{1,0:T(1,128)}', space=vmem, size = 0x9000, scoped, tag = 'internal scratch']
  %s0 = inlined_call_operand.vmem [shape: f32[8,16], index: 0, kind: input, shape index: {}]
  %s1 = inlined_call_operand.vmem [shape: f32[16,64], index: 1, kind: input, shape index: {}]
  %s2 = inlined_call_operand.vmem [shape: f32[1,64], index: 2, kind: input, shape index: {}]
  %s3 = inlined_call_operand.vmem [shape: f32[64,32], index: 3, kind: input, shape index: {}]
  %s4 = inlined_call_operand.vmem [shape: f32[1,32], index: 4, kind: input, shape index: {}]
  %s5 = inlined_call_operand.vmem [shape: f32[32,128], index: 5, kind: input, shape index: {}]
  %s6 = inlined_call_operand.vmem [shape: f32[1,128], index: 6, kind: input, shape index: {}]
  %s7 = inlined_call_operand.hbm [shape: f32[128,128], index: 7, kind: input, shape index: {}]
  %s8 = inlined_call_operand.vmem [shape: f32[1,128], index: 8, kind: input, shape index: {}]
  %s9 = inlined_call_operand.hbm [shape: f32[128,128], index: 9, kind: input, shape index: {}]
  %s10 = inlined_call_operand.vmem [shape: f32[1,128], index: 10, kind: input, shape index: {}]
  %s11 = inlined_call_operand.hbm [shape: f32[8,128], index: 11, kind: output, shape index: {}]
  %s12 = sld [smem:[#allocation0]]
  $region62: #{tpu_custom_call.1} parent=0
    _
  %s14 = ssub.s32 1, %s12
  %s15 = scalar_select 0, %s14, %s12
  $region1: #{tpu_custom_call.1} parent=0
    #allocation2 [shape = 'u8[65536]{0}', space=vmem, size = 0x10000, scoped, tag = 'input window, operand 7, single buffered']
    #allocation3 [shape = 's32[1]{0}', space=sflag, size = 0x4, scoped, tag = 'scoped memory for tpu_custom_call.1']
    #allocation4 [shape = 's32[1]{0}', space=sflag, size = 0x4, scoped, tag = 'scoped memory for tpu_custom_call.1']
    #allocation5 [shape = 'u8[65536]{0}', space=vmem, size = 0x10000, scoped, tag = 'input window, operand 9, single buffered']
    #allocation6 [shape = 's32[1]{0}', space=sflag, size = 0x4, scoped, tag = 'scoped memory for tpu_custom_call.1']
    #allocation7 [shape = 'u8[4096]{0}', space=vmem, size = 0x1000, scoped, tag = 'output window, operand 0, single buffered']
    %16 = vsyncpa [#allocation3], 0
    %17 = vsyncpa [#allocation6], 0
    %18 = vsyncpa [#allocation4], 0
    // Predicated region
    $region2: #{tpu_custom_call.1} parent=1 // pred_check
      _
    $region3: #{tpu_custom_call.1} parent=1 // pred_check_branch
      %20 = sbr.rel (0) target = $region5
    $region4: #{tpu_custom_call.1} parent=1 // pred_region
      _
    $region5: #{tpu_custom_call.1} parent=1 // pred_fallthru
      _
    // Predicated region
    $region6: #{tpu_custom_call.1} parent=1 // pred_check
      _
    $region7: #{tpu_custom_call.1} parent=1 // pred_check_branch
      %22 = sbr.rel (0) target = $region9
    $region8: #{tpu_custom_call.1} parent=1 // pred_region
      _
    $region9: #{tpu_custom_call.1} parent=1 // pred_fallthru
      _
    // Predicated region
    $region10: #{tpu_custom_call.1} parent=1 // pred_check
      _
    $region11: #{tpu_custom_call.1} parent=1 // pred_check_branch
      %24 = sbr.rel (0) target = $region13
    $region12: #{tpu_custom_call.1} parent=1 // pred_region
      _
    $region13: #{tpu_custom_call.1} parent=1 // pred_fallthru
      _
    // Predicated region
    $region14: #{tpu_custom_call.1} parent=1 // pred_check
      _
    $region15: #{tpu_custom_call.1} parent=1 // pred_check_branch
      %26 = sbr.rel (0) target = $region17
    $region16: #{tpu_custom_call.1} parent=1 // pred_region
      _
    $region17: #{tpu_custom_call.1} parent=1 // pred_fallthru
      _
    // Predicated region
    $region18: #{tpu_custom_call.1} parent=1 // pred_check
      _
    $region19: #{tpu_custom_call.1} parent=1 // pred_check_branch
      %28 = sbr.rel (0) target = $region21
    $region20: #{tpu_custom_call.1} parent=1 // pred_region
      _
    $region21: #{tpu_custom_call.1} parent=1 // pred_fallthru
      _
    // Predicated region
    $region22: #{tpu_custom_call.1} parent=1 // pred_check
      _
    $region23: #{tpu_custom_call.1} parent=1 // pred_check_branch
      %30 = sbr.rel (0) target = $region25
    $region24: #{tpu_custom_call.1} parent=1 // pred_region
      _
    $region25: #{tpu_custom_call.1} parent=1 // pred_fallthru
      _
    // Predicated region
    $region26: #{tpu_custom_call.1} parent=1 // pred_check
      _
    $region27: #{tpu_custom_call.1} parent=1 // pred_check_branch
      %32 = sbr.rel (0) target = $region29
    $region28: #{tpu_custom_call.1} parent=1 // pred_region
      _
    $region29: #{tpu_custom_call.1} parent=1 // pred_fallthru
      _
    // Predicated region
    $region30: #{tpu_custom_call.1} parent=1 // pred_check
      _
    $region31: #{tpu_custom_call.1} parent=1 // pred_check_branch
      %34 = sbr.rel (0) target = $region33
    $region32: #{tpu_custom_call.1} parent=1 // pred_region
      %36 = vsyncadd [#allocation3], 0
      %s37 = sshll.u32 %s7, 4
      %s38 = int_to_ptr.hbm [resolvable:$true] %s37
      %s39 = sshll.u32 [#allocation2], 4
      %s40 = int_to_ptr.vmem [resolvable:$true] %s39
      %45 = dma.hbm_to_vmem [thread:$0]  %s38, 2048, %s40, [#allocation3], 128, 128, 8
    $region33: #{tpu_custom_call.1} parent=1 // pred_fallthru
      _
    // Predicated region
    $region34: #{tpu_custom_call.1} parent=1 // pred_check
      _
    $region35: #{tpu_custom_call.1} parent=1 // pred_check_branch
      %47 = sbr.rel (0) target = $region37
    $region36: #{tpu_custom_call.1} parent=1 // pred_region
      _
    $region37: #{tpu_custom_call.1} parent=1 // pred_fallthru
      _
    // Predicated region
    $region38: #{tpu_custom_call.1} parent=1 // pred_check
      _
    $region39: #{tpu_custom_call.1} parent=1 // pred_check_branch
      %49 = sbr.rel (0) target = $region41
    $region40: #{tpu_custom_call.1} parent=1 // pred_region
      %51 = vsyncadd [#allocation6], 0
      %s52 = sshll.u32 %s9, 4
      %s53 = int_to_ptr.hbm [resolvable:$true] %s52
      %s54 = sshll.u32 [#allocation5], 4
      %s55 = int_to_ptr.vmem [resolvable:$true] %s54
      %60 = dma.hbm_to_vmem [thread:$0]  %s53, 2048, %s55, [#allocation6], 128, 128, 8
    $region41: #{tpu_custom_call.1} parent=1 // pred_fallthru
      _
    // Predicated region
    $region42: #{tpu_custom_call.1} parent=1 // pred_check
      _
    $region43: #{tpu_custom_call.1} parent=1 // pred_check_branch
      %62 = sbr.rel (0) target = $region45
    $region44: #{tpu_custom_call.1} parent=1 // pred_region
      _
    $region45: #{tpu_custom_call.1} parent=1 // pred_fallthru
      _
    // Predicated region
    $region46: #{tpu_custom_call.1} parent=1 // pred_check
      _
    $region47: #{tpu_custom_call.1} parent=1 // pred_check_branch
      %64 = sbr.rel (0) target = $region49
    $region48: #{tpu_custom_call.1} parent=1 // pred_region
      %66 = dma.done [#allocation3], 2048
    $region49: #{tpu_custom_call.1} parent=1 // pred_fallthru
      _
    // Predicated region
    $region50: #{tpu_custom_call.1} parent=1 // pred_check
      _
    $region51: #{tpu_custom_call.1} parent=1 // pred_check_branch
      %68 = sbr.rel (0) target = $region53
    $region52: #{tpu_custom_call.1} parent=1 // pred_region
      %70 = dma.done [#allocation6], 2048
    $region53: #{tpu_custom_call.1} parent=1 // pred_fallthru
      _
    %v71 = vld [vmem:[%s0] sm:$0xff]
    %v72 = vld [vmem:[%s1] sm:$0xff]
    %v73 = vld [vmem:[%s1 + $0x8] sm:$0xff]
    %v74 = vld [vmem:[%s2] sm:$0x1]
    %v76 = vperm.slane %v74, 0
    %vm78 = vcmask 130048
    %v80 = vsel %vm78, %v71, 0
    %82 = vmatpush.msra.mxu0 0.0
    %83 = vmatpush.msra.mxu0 0.0
    %84 = vmatpush.msra.mxu0 0.0
    %85 = vmatpush.msra.mxu0 0.0
    %86 = vmatpush.msra.mxu0 0.0
    %87 = vmatpush.msra.mxu0 0.0
    %88 = vmatpush.msra.mxu0 0.0
    %89 = vmatpush.msra.mxu0 0.0
    %90 = vmatpush.msra.mxu0 0.0
    %91 = vmatpush.msra.mxu0 0.0
    %92 = vmatpush.msra.mxu0 0.0
    %93 = vmatpush.msra.mxu0 0.0
    %94 = vmatpush.msra.mxu0 0.0
    %95 = vmatpush.msra.mxu0 0.0
    %96 = vmatpush.msra.mxu0 %v73
    %97 = vmatpush.msra.mxu0 %v72
    %98 = vmatmul.f32.gmra.mxu0 %v80
    %v99 = vpop.f32.mrf.mxu0
    %v100 = vadd.f32 %v76, %v99
    %101 = vdwg.mxu0
    %v102 = vmax.f32 %v100, 0.0
    %v103 = vld [vmem:[%s3] sm:$0xff]
    %v104 = vld [vmem:[%s3 + $0x8] sm:$0xff]
    %v105 = vld [vmem:[%s3 + $0x10] sm:$0xff]
    %v106 = vld [vmem:[%s3 + $0x18] sm:$0xff]
    %v107 = vld [vmem:[%s3 + $0x20] sm:$0xff]
    %v108 = vld [vmem:[%s3 + $0x28] sm:$0xff]
    %v109 = vld [vmem:[%s3 + $0x30] sm:$0xff]
    %v110 = vld [vmem:[%s3 + $0x38] sm:$0xff]
    %v111 = vld [vmem:[%s4] sm:$0x1]
    %v113 = vperm.slane %v111, 0
    %vm115 = vcmask 523264
    %v117 = vsel %vm115, %v102, 0
    %119 = vmatpush.msra.mxu0 0.0
    %120 = vmatpush.msra.mxu0 0.0
    %121 = vmatpush.msra.mxu0 0.0
    %122 = vmatpush.msra.mxu0 0.0
    %123 = vmatpush.msra.mxu0 0.0
    %124 = vmatpush.msra.mxu0 0.0
    %125 = vmatpush.msra.mxu0 0.0
    %126 = vmatpush.msra.mxu0 0.0
    %127 = vmatpush.msra.mxu0 %v110
    %128 = vmatpush.msra.mxu0 %v109
    %129 = vmatpush.msra.mxu0 %v108
    %130 = vmatpush.msra.mxu0 %v107
    %131 = vmatpush.msra.mxu0 %v106
    %132 = vmatpush.msra.mxu0 %v105
    %133 = vmatpush.msra.mxu0 %v104
    %134 = vmatpush.msra.mxu0 %v103
    %135 = vmatmul.f32.gmra.mxu0 %v117
    %v136 = vpop.f32.mrf.mxu0
    %v137 = vadd.f32 %v113, %v136
    %138 = vdwg.mxu0
    %v139 = vld [vmem:[%s5] sm:$0xff]
    %v140 = vld [vmem:[%s5 + $0x8] sm:$0xff]
    %v141 = vld [vmem:[%s5 + $0x10] sm:$0xff]
    %v142 = vld [vmem:[%s5 + $0x18] sm:$0xff]
    %v143 = vld [vmem:[%s6] sm:$0x1]
    %v145 = vperm.slane %v143, 0
    %vm147 = vcmask 261120
    %v149 = vsel %vm147, %v137, 0
    %151 = vmatpush.msra.mxu0 0.0
    %152 = vmatpush.msra.mxu0 0.0
    %153 = vmatpush.msra.mxu0 0.0
    %154 = vmatpush.msra.mxu0 0.0
    %155 = vmatpush.msra.mxu0 0.0
    %156 = vmatpush.msra.mxu0 0.0
    %157 = vmatpush.msra.mxu0 0.0
    %158 = vmatpush.msra.mxu0 0.0
    %159 = vmatpush.msra.mxu0 0.0
    %160 = vmatpush.msra.mxu0 0.0
    %161 = vmatpush.msra.mxu0 0.0
    %162 = vmatpush.msra.mxu0 0.0
    %163 = vmatpush.msra.mxu0 %v142
    %164 = vmatpush.msra.mxu0 %v141
    %165 = vmatpush.msra.mxu0 %v140
    %166 = vmatpush.msra.mxu0 %v139
    %167 = vmatmul.f32.gmra.mxu0 %v149
    %v168 = vpop.f32.mrf.mxu0
    %v169 = vadd.f32 %v145, %v168
    %170 = vdwg.mxu0
    %v171 = vtanh.pop %v169
    %v172 = vld [vmem:[#allocation2] sm:$0xff]
    %v173 = vld [vmem:[#allocation2 + $0x8] sm:$0xff]
    %v174 = vld [vmem:[#allocation2 + $0x10] sm:$0xff]
    %v175 = vld [vmem:[#allocation2 + $0x18] sm:$0xff]
    %v176 = vld [vmem:[#allocation2 + $0x20] sm:$0xff]
    %v177 = vld [vmem:[#allocation2 + $0x28] sm:$0xff]
    %v178 = vld [vmem:[#allocation2 + $0x30] sm:$0xff]
    %v179 = vld [vmem:[#allocation2 + $0x38] sm:$0xff]
    %v180 = vld [vmem:[#allocation2 + $0x40] sm:$0xff]
    %v181 = vld [vmem:[#allocation2 + $0x48] sm:$0xff]
    %v182 = vld [vmem:[#allocation2 + $0x50] sm:$0xff]
    %v183 = vld [vmem:[#allocation2 + $0x58] sm:$0xff]
    %v184 = vld [vmem:[#allocation2 + $0x60] sm:$0xff]
    %v185 = vld [vmem:[#allocation2 + $0x68] sm:$0xff]
    %v186 = vld [vmem:[#allocation2 + $0x70] sm:$0xff]
    %v187 = vld [vmem:[#allocation2 + $0x78] sm:$0xff]
    %v188 = vld [vmem:[%s8] sm:$0x1]
    %v190 = vperm.slane %v188, 0
    %192 = vmatpush.msra.mxu0 %v187
    %193 = vmatpush.msra.mxu0 %v186
    %194 = vmatpush.msra.mxu0 %v185
    %195 = vmatpush.msra.mxu0 %v184
    %196 = vmatpush.msra.mxu0 %v183
    %197 = vmatpush.msra.mxu0 %v182
    %198 = vmatpush.msra.mxu0 %v181
    %199 = vmatpush.msra.mxu0 %v180
    %200 = vmatpush.msra.mxu0 %v179
    %201 = vmatpush.msra.mxu0 %v178
    %202 = vmatpush.msra.mxu0 %v177
    %203 = vmatpush.msra.mxu0 %v176
    %204 = vmatpush.msra.mxu0 %v175
    %205 = vmatpush.msra.mxu0 %v174
    %206 = vmatpush.msra.mxu0 %v173
    %207 = vmatpush.msra.mxu0 %v172
    %208 = vmatmul.f32.gmra.mxu0 %v171
    %v209 = vpop.f32.mrf.mxu0
    %v210 = vadd.f32 %v190, %v209
    %211 = vdwg.mxu0
    %v212 = vtanh.pop %v210
    %v213 = vld [vmem:[#allocation5] sm:$0xff]
    %v214 = vld [vmem:[#allocation5 + $0x8] sm:$0xff]
    %v215 = vld [vmem:[#allocation5 + $0x10] sm:$0xff]
    %v216 = vld [vmem:[#allocation5 + $0x18] sm:$0xff]
    %v217 = vld [vmem:[#allocation5 + $0x20] sm:$0xff]
    %v218 = vld [vmem:[#allocation5 + $0x28] sm:$0xff]
    %v219 = vld [vmem:[#allocation5 + $0x30] sm:$0xff]
    %v220 = vld [vmem:[#allocation5 + $0x38] sm:$0xff]
    %v221 = vld [vmem:[#allocation5 + $0x40] sm:$0xff]
    %v222 = vld [vmem:[#allocation5 + $0x48] sm:$0xff]
    %v223 = vld [vmem:[#allocation5 + $0x50] sm:$0xff]
    %v224 = vld [vmem:[#allocation5 + $0x58] sm:$0xff]
    %v225 = vld [vmem:[#allocation5 + $0x60] sm:$0xff]
    %v226 = vld [vmem:[#allocation5 + $0x68] sm:$0xff]
    %v227 = vld [vmem:[#allocation5 + $0x70] sm:$0xff]
    %v228 = vld [vmem:[#allocation5 + $0x78] sm:$0xff]
    %v229 = vld [vmem:[%s10] sm:$0x1]
    %v231 = vperm.slane %v229, 0
    %233 = vmatpush.msra.mxu0 %v228
    %234 = vmatpush.msra.mxu0 %v227
    %235 = vmatpush.msra.mxu0 %v226
    %236 = vmatpush.msra.mxu0 %v225
    %237 = vmatpush.msra.mxu0 %v224
    %238 = vmatpush.msra.mxu0 %v223
    %239 = vmatpush.msra.mxu0 %v222
    %240 = vmatpush.msra.mxu0 %v221
    %241 = vmatpush.msra.mxu0 %v220
    %242 = vmatpush.msra.mxu0 %v219
    %243 = vmatpush.msra.mxu0 %v218
    %244 = vmatpush.msra.mxu0 %v217
    %245 = vmatpush.msra.mxu0 %v216
    %246 = vmatpush.msra.mxu0 %v215
    %247 = vmatpush.msra.mxu0 %v214
    %248 = vmatpush.msra.mxu0 %v213
    %249 = vmatmul.f32.gmra.mxu0 %v212
    %v250 = vpop.f32.mrf.mxu0
    %v251 = vadd.f32 %v231, %v250
    %252 = vdwg.mxu0
    %253 = vst [vmem:[#allocation7] sm:$0xff] %v251
    // Predicated region
    $region54: #{tpu_custom_call.1} parent=1 // pred_check
      _
    $region55: #{tpu_custom_call.1} parent=1 // pred_check_branch
      %255 = sbr.rel (0) target = $region57
    $region56: #{tpu_custom_call.1} parent=1 // pred_region
      %257 = vsyncadd [#allocation4], 0
      %s259 = sshll.u32 [#allocation7], 4
      %s260 = int_to_ptr.vmem [resolvable:$true] %s259
      %s261 = sshll.u32 %s11, 4
      %s262 = int_to_ptr.hbm [resolvable:$true] %s261
      %264 = dma.vmem_to_hbm [thread:$0]  %s260, 128, %s262, [#allocation4]
    $region57: #{tpu_custom_call.1} parent=1 // pred_fallthru
      _
    // Predicated region
    $region58: #{tpu_custom_call.1} parent=1 // pred_check
      _
    $region59: #{tpu_custom_call.1} parent=1 // pred_check_branch
      %266 = sbr.rel (0) target = $region61
    $region60: #{tpu_custom_call.1} parent=1 // pred_region
      %268 = dma.done [#allocation4], 128
    $region61: #{tpu_custom_call.1} parent=1 // pred_fallthru
      _
    %269 = vsyncpa [#allocation3], 1
    %270 = vsyncpa [#allocation6], 1
    %271 = vsyncpa [#allocation4], 1

</llo_original>
